<compile_context>
chip_gen: v7x
topology: tpu7x:2x2x1
jax: 0.10.0
libtpu: 0.0.40
codegen_flags: <defaults>
</compile_context>

<pallas_src>
import jax
import jax.numpy as jnp
from jax.experimental import pallas as pl
from jax.experimental.pallas import tpu as pltpu


def _make_kernel(B, C, C4, HW):
    inv_hw = 1.0 / float(HW)

    def kernel(x_ref, w1_ref, b1_ref, w2_ref, b2_ref, o_ref):
        # x tile: (B, C, HW), pixels lane-dense, channels in sublanes.
        x = x_ref[...].astype(jnp.float32)

        # ---- global pooling (AdaptiveAvgPool2d(1) / AdaptiveMaxPool2d(1)) --------------
        gap = jnp.sum(x, axis=-1) * inv_hw                     # (B, C)
        gmp = jnp.max(x, axis=-1)                              # (B, C)

        # Pack both branches for every image in the tile as columns of one matrix:
        # columns [0:B] = avg-pool, [B:2B] = max-pool.
        pooled = jnp.concatenate([gap, gmp], axis=0).T         # (C, 2B)

        # ---- shared MLP: 1x1 conv (C->C/4) + leaky_relu(0.2) + 1x1 conv (C/4->C) -------
        h = jnp.dot(w1_ref[...], pooled,
                    preferred_element_type=jnp.float32) + b1_ref[...]    # (C4, 2B)
        h = jnp.where(h >= 0, h, 0.2 * h)                      # leaky_relu(0.2)
        y = jnp.dot(w2_ref[...], h,
                    preferred_element_type=jnp.float32) + b2_ref[...]    # (C, 2B)

        # ---- sum avg/max branches, sigmoid, lane-dense store ---------------------------
        o_ref[0] = jax.nn.sigmoid(y[:, :B] + y[:, B:])         # (C, B)

    return kernel


def channel_attention_forward(x_nchw, params, *, target_tile_bytes=512 * 1024):
    """Pallas forward pass. x_nchw: (N, C, H, W) -> (N, C, 1, 1) float32."""
    N, C, H, W = x_nchw.shape
    HW = H * W
    C4 = params["w1"].shape[0]

    # lane-dense working layout, native dtype (no wrapper-side f32 upcast / extra HBM copy).
    x = x_nchw.reshape(N, C, HW)

    # ---- batch-tile sizing: big x DMAs, but >=2 grid steps when N>=2 (v7x megacore) -----
    bytes_per_image = C * HW * x.dtype.itemsize
    b_tile = max(1, target_tile_bytes // bytes_per_image)
    if N >= 2:
        b_tile = min(b_tile, (N + 1) // 2)
    b_tile = max(1, min(b_tile, N))
    n_steps = -(-N // b_tile)                                  # ceil
    n_pad = n_steps * b_tile
    if n_pad != N:
        x = jnp.pad(x, ((0, n_pad - N), (0, 0), (0, 0)))       # padded rows sliced off below

    # parameter re-layout (pure-JAX glue): 1x1 convs -> plain matrices / column biases.
    w1 = params["w1"][:, :, 0, 0].astype(jnp.float32)          # (C4, C)
    b1 = params["b1"].reshape(C4, 1).astype(jnp.float32)
    w2 = params["w2"][:, :, 0, 0].astype(jnp.float32)          # (C, C4)
    b2 = params["b2"].reshape(C, 1).astype(jnp.float32)

    kernel = _make_kernel(b_tile, C, C4, HW)

    grid_spec = pltpu.PrefetchScalarGridSpec(
        num_scalar_prefetch=0,
        grid=(n_steps,),
        in_specs=[
            pl.BlockSpec((b_tile, C, HW), lambda b: (b, 0, 0)),   # B_TILE images per step
            pl.BlockSpec((C4, C), lambda b: (0, 0)),              # MLP conv1 weight
            pl.BlockSpec((C4, 1), lambda b: (0, 0)),              # MLP conv1 bias
            pl.BlockSpec((C, C4), lambda b: (0, 0)),              # MLP conv2 weight
            pl.BlockSpec((C, 1), lambda b: (0, 0)),               # MLP conv2 bias
        ],
        out_specs=pl.BlockSpec((1, C, b_tile), lambda b: (b, 0, 0)),  # lane-dense slab
    )

    out = pl.pallas_call(
        kernel,
        out_shape=jax.ShapeDtypeStruct((n_steps, C, b_tile), jnp.float32),
        grid_spec=grid_spec,
        compiler_params=pltpu.CompilerParams(
            dimension_semantics=("parallel",)),                 # batch tiles across TCs on v7x
    )(x, w1, b1, w2, b2)

    # (n_steps, C, b_tile) -> (N, C, 1, 1); tiny array, wrapper-side plumbing only.
    out = jnp.transpose(out, (0, 2, 1)).reshape(n_pad, C)[:N]
    return out.reshape(N, C, 1, 1)


# ---------------------------- pure-JAX reference ----------------------------------------
def _conv1x1_nchw(x, w, b):
    out = jax.lax.conv_general_dilated(
        x, w, window_strides=(1, 1), padding="VALID",
        dimension_numbers=("NCHW", "OIHW", "NCHW"),
        precision=jax.lax.Precision.HIGHEST)
    return out + b.reshape(1, -1, 1, 1)


def reference_forward(x, p):
    gap = jnp.mean(x, axis=(2, 3), keepdims=True)              # AdaptiveAvgPool2d(1)
    gmp = jnp.max(x, axis=(2, 3), keepdims=True)               # AdaptiveMaxPool2d(1)

    def mlp(v):
        h = _conv1x1_nchw(v, p["w1"], p["b1"])
        h = jnp.where(h >= 0, h, 0.2 * h)                      # leaky_relu(0.2)
        return _conv1x1_nchw(h, p["w2"], p["b2"])

    return jax.nn.sigmoid(mlp(gap) + mlp(gmp))


if __name__ == "__main__":
    # _channel_attention_module_(in_channels=8, stride=1, dilation=1, bias=True)
    N, C, H, W = 2, 8, 16, 16
    C4 = C // 4

    key = jax.random.PRNGKey(0)
    ks = jax.random.split(key, 5)
    s = 0.2
    params = dict(
        w1=jax.random.normal(ks[0], (C4, C, 1, 1), jnp.float32) * s,   # 1x1 conv C -> C/4
        b1=jax.random.normal(ks[1], (C4,), jnp.float32) * s,
        w2=jax.random.normal(ks[2], (C, C4, 1, 1), jnp.float32) * s,   # 1x1 conv C/4 -> C
        b2=jax.random.normal(ks[3], (C,), jnp.float32) * s,
    )
    x = jax.random.normal(ks[4], (N, C, H, W), jnp.float32)

    out = jax.block_until_ready(channel_attention_forward(x, params))
    ref = jax.block_until_ready(reference_forward(x, params))

    err = float(jnp.max(jnp.abs(out - ref)))
    if not (err < 2e-2):
        raise AssertionError(f"Pallas kernel mismatch vs reference: max abs err = {err}")

    print("KERNEL_OK")
</pallas_src>

<mosaic_0001>
module attributes {stable_mosaic.version = 11 : i64} {
  func.func @kernel(%arg0: i32, %arg1: memref<1x8x256xf32, #tpu.memory_space<vmem>>, %arg2: memref<2x8xf32, #tpu.memory_space<vmem>>, %arg3: memref<2x1xf32, #tpu.memory_space<vmem>>, %arg4: memref<8x2xf32, #tpu.memory_space<vmem>>, %arg5: memref<8x1xf32, #tpu.memory_space<vmem>>, %arg6: memref<1x8x1xf32, #tpu.memory_space<vmem>>) attributes {dimension_semantics = [#tpu.dimension_semantics<parallel>], iteration_bounds = array<i64: 2>, scalar_prefetch = 0 : i64, scratch_operands = 0 : i64, tpu.core_type = #tpu.core_type<tc>, window_params = [{transform_indices = @transform_0, window_bounds = array<i64: 1, 8, 256>}, {pipeline_mode = #tpu.pipeline_mode<synchronous>, transform_indices = @transform_1, window_bounds = array<i64: 2, 8>}, {pipeline_mode = #tpu.pipeline_mode<synchronous>, transform_indices = @transform_2, window_bounds = array<i64: 2, 1>}, {pipeline_mode = #tpu.pipeline_mode<synchronous>, transform_indices = @transform_3, window_bounds = array<i64: 8, 2>}, {pipeline_mode = #tpu.pipeline_mode<synchronous>, transform_indices = @transform_4, window_bounds = array<i64: 8, 1>}, {transform_indices = @transform_5, window_bounds = array<i64: 1, 8, 1>}]} {
    %c0 = arith.constant 0 : index
    %c0_0 = arith.constant 0 : index
    %c0_1 = arith.constant 0 : index
    %0 = vector.load %arg1[%c0, %c0_0, %c0_1] : memref<1x8x256xf32, #tpu.memory_space<vmem>>, vector<1x8x256xf32>
    %cst = arith.constant dense<0.000000e+00> : vector<1x8xf32>
    %1 = vector.multi_reduction <add>, %0, %cst [2] : vector<1x8x256xf32> to vector<1x8xf32>
    %cst_2 = arith.constant 3.906250e-03 : f32
    %2 = vector.broadcast %cst_2 : f32 to vector<1x8xf32>
    %3 = arith.mulf %1, %2 : vector<1x8xf32>
    %cst_3 = arith.constant dense<0xFF800000> : vector<1x8xf32>
    %4 = vector.multi_reduction <maximumf>, %0, %cst_3 [2] : vector<1x8x256xf32> to vector<1x8xf32>
    %5 = tpu.concatenate %3, %4 in 0 : vector<1x8xf32>, vector<1x8xf32> -> vector<2x8xf32>
    %6 = tpu.transpose %5, [1, 0] : vector<2x8xf32> -> vector<8x2xf32>
    %c0_4 = arith.constant 0 : index
    %c0_5 = arith.constant 0 : index
    %7 = vector.load %arg2[%c0_4, %c0_5] : memref<2x8xf32, #tpu.memory_space<vmem>>, vector<2x8xf32>
    %cst_6 = arith.constant dense<0.000000e+00> : vector<2x2xf32>
    %8 = tpu.matmul %7, %6, %cst_6 {dimension_numbers = #tpu.dot_dimension_numbers<[1], [0], [0], [1], [0, 0, 1, 1], [], []>} : vector<2x8xf32>, vector<8x2xf32>, vector<2x2xf32> -> vector<2x2xf32>
    %c0_7 = arith.constant 0 : index
    %c0_8 = arith.constant 0 : index
    %9 = vector.load %arg3[%c0_7, %c0_8] : memref<2x1xf32, #tpu.memory_space<vmem>>, vector<2x1xf32>
    %10 = vector.broadcast %9 : vector<2x1xf32> to vector<2x2xf32>
    %11 = arith.addf %8, %10 : vector<2x2xf32>
    %cst_9 = arith.constant 0.000000e+00 : f32
    %12 = vector.broadcast %cst_9 : f32 to vector<2x2xf32>
    %13 = arith.cmpf oge, %11, %12 : vector<2x2xf32>
    %cst_10 = arith.constant 2.000000e-01 : f32
    %14 = vector.broadcast %cst_10 : f32 to vector<2x2xf32>
    %15 = arith.mulf %14, %11 : vector<2x2xf32>
    %16 = arith.select %13, %11, %15 : vector<2x2xi1>, vector<2x2xf32>
    %c0_11 = arith.constant 0 : index
    %c0_12 = arith.constant 0 : index
    %17 = vector.load %arg4[%c0_11, %c0_12] : memref<8x2xf32, #tpu.memory_space<vmem>>, vector<8x2xf32>
    %cst_13 = arith.constant dense<0.000000e+00> : vector<8x2xf32>
    %18 = tpu.matmul %17, %16, %cst_13 {dimension_numbers = #tpu.dot_dimension_numbers<[1], [0], [0], [1], [0, 0, 1, 1], [], []>} : vector<8x2xf32>, vector<2x2xf32>, vector<8x2xf32> -> vector<8x2xf32>
    %c0_14 = arith.constant 0 : index
    %c0_15 = arith.constant 0 : index
    %19 = vector.load %arg5[%c0_14, %c0_15] : memref<8x1xf32, #tpu.memory_space<vmem>>, vector<8x1xf32>
    %20 = vector.broadcast %19 : vector<8x1xf32> to vector<8x2xf32>
    %21 = arith.addf %18, %20 : vector<8x2xf32>
    %22 = vector.extract_strided_slice %21 {offsets = [0, 0], sizes = [8, 1], strides = [1, 1]} : vector<8x2xf32> to vector<8x1xf32>
    %23 = vector.extract_strided_slice %21 {offsets = [0, 1], sizes = [8, 1], strides = [1, 1]} : vector<8x2xf32> to vector<8x1xf32>
    %24 = arith.addf %22, %23 : vector<8x1xf32>
    %25 = arith.negf %24 : vector<8x1xf32>
    %26 = math.exp %25 : vector<8x1xf32>
    %cst_16 = arith.constant 1.000000e+00 : f32
    %27 = vector.broadcast %cst_16 : f32 to vector<8x1xf32>
    %28 = arith.addf %27, %26 : vector<8x1xf32>
    %29 = arith.divf %27, %28 : vector<8x1xf32>
    %c0_17 = arith.constant 0 : index
    %c0_18 = arith.constant 0 : index
    %c0_19 = arith.constant 0 : index
    %30 = vector.load %arg6[%c0_17, %c0_18, %c0_19] : memref<1x8x1xf32, #tpu.memory_space<vmem>>, vector<1x8x1xf32>
    %31 = vector.shape_cast %30 : vector<1x8x1xf32> to vector<8x1xf32>
    %32 = vector.shape_cast %29 : vector<8x1xf32> to vector<1x8x1xf32>
    tpu.vector_store %arg6[%c0_17, %c0_18, %c0_19], %32 {strides = array<i32>} : memref<1x8x1xf32, #tpu.memory_space<vmem>>, vector<1x8x1xf32>,
    return
  }
  func.func @transform_0(%arg0: i32) -> (i32, i32, i32) {
    %c0_i32 = arith.constant 0 : i32
    %c0_i32_0 = arith.constant 0 : i32
    %c0_i32_1 = arith.constant 0 : i32
    return %arg0, %c0_i32, %c0_i32_0 : i32, i32, i32
  }
  func.func @transform_1(%arg0: i32) -> (i32, i32) {
    %c0_i32 = arith.constant 0 : i32
    %c0_i32_0 = arith.constant 0 : i32
    %c0_i32_1 = arith.constant 0 : i32
    return %c0_i32, %c0_i32_0 : i32, i32
  }
  func.func @transform_2(%arg0: i32) -> (i32, i32) {
    %c0_i32 = arith.constant 0 : i32
    %c0_i32_0 = arith.constant 0 : i32
    %c0_i32_1 = arith.constant 0 : i32
    return %c0_i32, %c0_i32_0 : i32, i32
  }
  func.func @transform_3(%arg0: i32) -> (i32, i32) {
    %c0_i32 = arith.constant 0 : i32
    %c0_i32_0 = arith.constant 0 : i32
    %c0_i32_1 = arith.constant 0 : i32
    return %c0_i32, %c0_i32_0 : i32, i32
  }
  func.func @transform_4(%arg0: i32) -> (i32, i32) {
    %c0_i32 = arith.constant 0 : i32
    %c0_i32_0 = arith.constant 0 : i32
    %c0_i32_1 = arith.constant 0 : i32
    return %c0_i32, %c0_i32_0 : i32, i32
  }
  func.func @transform_5(%arg0: i32) -> (i32, i32, i32) {
    %c0_i32 = arith.constant 0 : i32
    %c0_i32_0 = arith.constant 0 : i32
    %c0_i32_1 = arith.constant 0 : i32
    return %arg0, %c0_i32, %c0_i32_0 : i32, i32, i32
  }
}

</mosaic_0001>

<llo_original>
// kernel: tpu_custom_call.1
$region0: #{tpu_custom_call.1}
  #allocation0 [shape = 'u32[]', space=smem, size = 0x4, offset = 0x4, fixed_abs, tag = 'smem constant byte address 0x4 - core index']
  #allocation1 [shape = 'u32[144,128]{1,0:T(1,128)}', space=vmem, size = 0x12000, scoped, tag = 'internal scratch']
  %s0 = inlined_call_operand.hbm [shape: f32[2,8,256], index: 0, kind: input, shape index: {}]
  %s1 = inlined_call_operand.vmem [shape: f32[2,8], index: 1, kind: input, shape index: {}]
  %s2 = inlined_call_operand.vmem [shape: f32[2,1], index: 2, kind: input, shape index: {}]
  %s3 = inlined_call_operand.vmem [shape: f32[8,2], index: 3, kind: input, shape index: {}]
  %s4 = inlined_call_operand.vmem [shape: f32[8,1], index: 4, kind: input, shape index: {}]
  %s5 = inlined_call_operand.vmem [shape: f32[2,8,1], index: 5, kind: output, shape index: {}]
  %s6 = sld [smem:[#allocation0]]
  $region57: #{tpu_custom_call.1} parent=0
    _
  %s8 = ssub.s32 1, %s6
  %s9 = scalar_select 0, %s8, %s6
  $region1: #{tpu_custom_call.1} parent=0
    #allocation2 [shape = 'u8[16384]{0}', space=vmem, size = 0x4000, scoped, tag = 'input window, operand 0']
    #allocation3 [shape = 's32[2]{0}', space=sflag, size = 0x8, scoped, tag = 'scoped memory for tpu_custom_call.1']
    %10 = vsyncpa [#allocation3], 0
    %s11 = scalar_lea.sflag [#allocation3], 1
    %12 = vsyncpa %s11, 0
    loop: start=0, step=1, limit=4
    $region2: #{tpu_custom_call.1} parent=1 // loop_pre_header
      _
    $region3: #{tpu_custom_call.1} parent=1 // loop_header
      %s14 = sphi 0, %s18
      %p15 = scmp.ge.s32.totalorder %s14, 4
      %s24 = sphi 0, %s26
      %s27 = sphi 0, %s24
      %s28 = sphi 0, %s27
      %s44 = sphi 0, %s28
      %s48 = sphi 0, %s48
      %s50 = sphi 0, %s48
      %s51 = sphi 0, %s50
      %s65 = sphi 0, %s51
      %s69 = sphi 0, %s69
      %s71 = sphi 0, %s69
      %s72 = sphi 0, %s71
      %s86 = sphi 0, %s72
      %s90 = sphi 0, %s90
      %s92 = sphi 0, %s90
      %s93 = sphi 0, %s92
      %s107 = sphi 0, %s93
      %s111 = sphi 0, %s111
      %s113 = sphi 0, %s111
      %s114 = sphi 0, %s113
      %s128 = sphi 0, %s114
      %s134 = sphi 0, %s136
      %s137 = sphi 0, %s134
      %s138 = sphi 0, %s137
      %s154 = sphi 0, %s138
    $region4: #{tpu_custom_call.1} parent=1 // loop_header_branch
      %17 = sbr.rel (%p15) target = $region8
    $region5: #{tpu_custom_call.1} parent=1 // loop_body
      %s19 = ssub.s32 %s14, 1
      %s20 = ssub.s32 %s14, 2
      %s21 = sadd.s32 %s14, 1
      %s22 = ssub.s32 %s14, %s21
      %p23 = scmp.eq.s32.totalorder %s22, 0
      %s25 = sadd.s32 %s24, 1
      %s26 = scalar_select %p23, %s24, %s25
      %p29 = pneg %p23
      %p30 = scmp.eq.s32.totalorder %s14, 1
      %p31 = por %p29, %p30
      %p32 = scmp.ne.s32.totalorder %s24, %s27
      %p33 = scmp.eq.s32.totalorder %s14, 0
      %p34 = por %p32, %p33
      %p35 = scmp.ne.s32.totalorder %s24, %s27
      %p36 = scmp.eq.s32.totalorder %s19, 1
      %p37 = por %p35, %p36
      %p38 = scmp.ne.s32.totalorder %s27, %s28
      %p39 = scmp.eq.s32.totalorder %s19, 0
      %p40 = por %p38, %p39
      %p41 = scmp.ne.s32.totalorder %s27, %s28
      %p42 = scmp.eq.s32.totalorder %s20, 1
      %p43 = por %p41, %p42
      %p45 = scmp.ne.s32.totalorder %s28, %s44
      %p46 = scmp.eq.s32.totalorder %s20, 0
      %p47 = por %p45, %p46
      %s49 = sadd.s32 %s48, 1
      %p52 = scmp.eq.s32.totalorder %s14, 1
      %p53 = scmp.ne.s32.totalorder %s48, %s50
      %p54 = scmp.eq.s32.totalorder %s14, 0
      %p55 = por %p53, %p54
      %p56 = scmp.ne.s32.totalorder %s48, %s50
      %p57 = scmp.eq.s32.totalorder %s19, 1
      %p58 = por %p56, %p57
      %p59 = scmp.ne.s32.totalorder %s50, %s51
      %p60 = scmp.eq.s32.totalorder %s19, 0
      %p61 = por %p59, %p60
      %p62 = scmp.ne.s32.totalorder %s50, %s51
      %p63 = scmp.eq.s32.totalorder %s20, 1
      %p64 = por %p62, %p63
      %p66 = scmp.ne.s32.totalorder %s51, %s65
      %p67 = scmp.eq.s32.totalorder %s20, 0
      %p68 = por %p66, %p67
      %s70 = sadd.s32 %s69, 1
      %p73 = scmp.eq.s32.totalorder %s14, 1
      %p74 = scmp.ne.s32.totalorder %s69, %s71
      %p75 = scmp.eq.s32.totalorder %s14, 0
      %p76 = por %p74, %p75
      %p77 = scmp.ne.s32.totalorder %s69, %s71
      %p78 = scmp.eq.s32.totalorder %s19, 1
      %p79 = por %p77, %p78
      %p80 = scmp.ne.s32.totalorder %s71, %s72
      %p81 = scmp.eq.s32.totalorder %s19, 0
      %p82 = por %p80, %p81
      %p83 = scmp.ne.s32.totalorder %s71, %s72
      %p84 = scmp.eq.s32.totalorder %s20, 1
      %p85 = por %p83, %p84
      %p87 = scmp.ne.s32.totalorder %s72, %s86
      %p88 = scmp.eq.s32.totalorder %s20, 0
      %p89 = por %p87, %p88
      %s91 = sadd.s32 %s90, 1
      %p94 = scmp.eq.s32.totalorder %s14, 1
      %p95 = scmp.ne.s32.totalorder %s90, %s92
      %p96 = scmp.eq.s32.totalorder %s14, 0
      %p97 = por %p95, %p96
      %p98 = scmp.ne.s32.totalorder %s90, %s92
      %p99 = scmp.eq.s32.totalorder %s19, 1
      %p100 = por %p98, %p99
      %p101 = scmp.ne.s32.totalorder %s92, %s93
      %p102 = scmp.eq.s32.totalorder %s19, 0
      %p103 = por %p101, %p102
      %p104 = scmp.ne.s32.totalorder %s92, %s93
      %p105 = scmp.eq.s32.totalorder %s20, 1
      %p106 = por %p104, %p105
      %p108 = scmp.ne.s32.totalorder %s93, %s107
      %p109 = scmp.eq.s32.totalorder %s20, 0
      %p110 = por %p108, %p109
      %s112 = sadd.s32 %s111, 1
      %p115 = scmp.eq.s32.totalorder %s14, 1
      %p116 = scmp.ne.s32.totalorder %s111, %s113
      %p117 = scmp.eq.s32.totalorder %s14, 0
      %p118 = por %p116, %p117
      %p119 = scmp.ne.s32.totalorder %s111, %s113
      %p120 = scmp.eq.s32.totalorder %s19, 1
      %p121 = por %p119, %p120
      %p122 = scmp.ne.s32.totalorder %s113, %s114
      %p123 = scmp.eq.s32.totalorder %s19, 0
      %p124 = por %p122, %p123
      %p125 = scmp.ne.s32.totalorder %s113, %s114
      %p126 = scmp.eq.s32.totalorder %s20, 1
      %p127 = por %p125, %p126
      %p129 = scmp.ne.s32.totalorder %s114, %s128
      %p130 = scmp.eq.s32.totalorder %s20, 0
      %p131 = por %p129, %p130
      %s132 = ssub.s32 %s14, %s21
      %p133 = scmp.eq.s32.totalorder %s132, 0
      %s135 = sadd.s32 %s134, 1
      %s136 = scalar_select %p133, %s134, %s135
      %p139 = pneg %p133
      %p140 = scmp.eq.s32.totalorder %s14, 1
      %p141 = por %p139, %p140
      %p142 = scmp.ne.s32.totalorder %s134, %s137
      %p143 = scmp.eq.s32.totalorder %s14, 0
      %p144 = por %p142, %p143
      %p145 = scmp.ne.s32.totalorder %s134, %s137
      %p146 = scmp.eq.s32.totalorder %s19, 1
      %p147 = por %p145, %p146
      %p148 = scmp.ne.s32.totalorder %s137, %s138
      %p149 = scmp.eq.s32.totalorder %s19, 0
      %p150 = por %p148, %p149
      %p151 = scmp.ne.s32.totalorder %s137, %s138
      %p152 = scmp.eq.s32.totalorder %s20, 1
      %p153 = por %p151, %p152
      %p155 = scmp.ne.s32.totalorder %s138, %s154
      %p156 = scmp.eq.s32.totalorder %s20, 0
      %p157 = por %p155, %p156
      %p158 = scmp.le.s32.totalorder 1, %s14
      %p159 = scmp.lt.s32.totalorder %s14, 3
      %p160 = pnand %p158, %p159
      %p161 = pneg %p160
      // Predicated region
      $region9: #{tpu_custom_call.1} parent=5 // pred_check
        _
      $region10: #{tpu_custom_call.1} parent=5 // pred_check_branch
        %163 = sbr.rel (%p160) target = $region12
      $region11: #{tpu_custom_call.1} parent=5 // pred_region
        %s164 = ssub.s32 %s14, 1
        // Predicated region
        $region13: #{tpu_custom_call.1} parent=11 // pred_check
          %p165 = pneg %p61
        $region14: #{tpu_custom_call.1} parent=11 // pred_check_branch
          %167 = sbr.rel (%p165) target = $region16
        $region15: #{tpu_custom_call.1} parent=11 // pred_region
          _
        $region16: #{tpu_custom_call.1} parent=11 // pred_fallthru
          _
        // Predicated region
        $region17: #{tpu_custom_call.1} parent=11 // pred_check
          %p168 = pneg %p82
        $region18: #{tpu_custom_call.1} parent=11 // pred_check_branch
          %170 = sbr.rel (%p168) target = $region20
        $region19: #{tpu_custom_call.1} parent=11 // pred_region
          _
        $region20: #{tpu_custom_call.1} parent=11 // pred_fallthru
          _
        // Predicated region
        $region21: #{tpu_custom_call.1} parent=11 // pred_check
          %p171 = pneg %p103
        $region22: #{tpu_custom_call.1} parent=11 // pred_check_branch
          %173 = sbr.rel (%p171) target = $region24
        $region23: #{tpu_custom_call.1} parent=11 // pred_region
          _
        $region24: #{tpu_custom_call.1} parent=11 // pred_fallthru
          _
        // Predicated region
        $region25: #{tpu_custom_call.1} parent=11 // pred_check
          %p174 = pneg %p124
        $region26: #{tpu_custom_call.1} parent=11 // pred_check_branch
          %176 = sbr.rel (%p174) target = $region28
        $region27: #{tpu_custom_call.1} parent=11 // pred_region
          _
        $region28: #{tpu_custom_call.1} parent=11 // pred_fallthru
          _
      $region12: #{tpu_custom_call.1} parent=5 // pred_fallthru
        _
      %p177 = scmp.lt.s32.totalorder %s14, 2
      // Predicated region
      $region29: #{tpu_custom_call.1} parent=5 // pred_check
        %p178 = pneg %p177
      $region30: #{tpu_custom_call.1} parent=5 // pred_check_branch
        %180 = sbr.rel (%p178) target = $region32
      $region31: #{tpu_custom_call.1} parent=5 // pred_region
        // Predicated region
        $region33: #{tpu_custom_call.1} parent=31 // pred_check
          %p181 = pneg %p34
        $region34: #{tpu_custom_call.1} parent=31 // pred_check_branch
          %183 = sbr.rel (%p181) target = $region36
        $region35: #{tpu_custom_call.1} parent=31 // pred_region
          %s184 = sand.u32 %s24, 1
          %s185 = scalar_lea.sflag [#allocation3], %s184
          %s186 = sand.u32 %s24, 1
          %s187 = smul.addr %s186, 16
          %s188 = scalar_lea.vmem [#allocation2], %s187
          %s190 = ssub.s32 256, 256
          %191 = vsyncadd %s185, %s190
          %s192 = smul.addr %s14, 2
          %s193 = smul.addr %s192, 128
          %s194 = scalar_lea.hbm %s0, %s193
          %s196 = sshll.u32 %s188, 4
          %s197 = int_to_ptr.vmem [resolvable:$true] %s196
          %199 = dma.hbm_to_vmem [thread:$0]  %s194, 256, %s197, %s185
        $region36: #{tpu_custom_call.1} parent=31 // pred_fallthru
          _
      $region32: #{tpu_custom_call.1} parent=5 // pred_fallthru
        _
      %p200 = scmp.le.s32.totalorder 1, %s14
      %p201 = scmp.lt.s32.totalorder %s14, 3
      %p202 = pnand %p200, %p201
      %p203 = pneg %p202
      // Predicated region
      $region37: #{tpu_custom_call.1} parent=5 // pred_check
        _
      $region38: #{tpu_custom_call.1} parent=5 // pred_check_branch
        %205 = sbr.rel (%p202) target = $region40
      $region39: #{tpu_custom_call.1} parent=5 // pred_region
        %s206 = ssub.s32 %s14, 1
        %s207 = sand.u32 %s27, 1
        %s208 = scalar_lea.sflag [#allocation3], %s207
        %s209 = sand.u32 %s27, 1
        %s210 = smul.addr %s209, 16
        %s211 = scalar_lea.vmem [#allocation2], %s210
        // Predicated region
        $region41: #{tpu_custom_call.1} parent=39 // pred_check
          %p212 = pneg %p40
        $region42: #{tpu_custom_call.1} parent=39 // pred_check_branch
          %214 = sbr.rel (%p212) target = $region44
        $region43: #{tpu_custom_call.1} parent=39 // pred_region
          %215 = dma.done %s208, 256
        $region44: #{tpu_custom_call.1} parent=39 // pred_fallthru
          _
        %s216 = sand.u32 %s27, 1
        %s217 = scalar_lea.sflag [#allocation3], %s216
        %s218 = sand.u32 %s27, 1
        %s219 = smul.addr %s218, 16
        %s220 = scalar_lea.vmem [#allocation2], %s219
        %p221 = pneg %p40
        %p222 = pneg %p37
        %p223 = pneg %p61
        %p224 = pneg %p58
        %p225 = pneg %p82
        %p226 = pneg %p79
        %p227 = pneg %p103
        %p228 = pneg %p100
        %p229 = pneg %p124
        %p230 = pneg %p121
        %p231 = pneg %p150
        %p232 = pneg %p147
        %p233 = scmp.lt.s32.totalorder %s19, 1
        %s234 = scalar_select %p233, %s19, 1
        %s235 = smul.addr %s234, 8
        %s236 = scalar_lea.vmem %s5, %s235
        %p237 = scmp.lt.s32.totalorder %s19, 1
        %s238 = scalar_select %p237, %s19, 1
        %s239 = smul.addr %s238, 8
        %s240 = scalar_lea.vmem %s5, %s239
        %v241 = vld [vmem:[%s211] sm:$0xff]
        %v242 = vld [vmem:[%s211 + $0x8] sm:$0xff]
        %v243 = vadd.f32 %v241, %v242
        %244 = vadd.xlane.f32.xlu0 %v243
        %v245 = vpop.xlane.xlu0 %244
        %v246 = vmul.f32 %v245, 0.00390625
        %v247 = vmax.f32 %v241, %v242
        %248 = vmax.xlane.f32.xlu0 %v247
        %v249 = vpop.xlane.xlu0 %248
        %v251 = vlaneseq
        %v252 = vand.u32 %v251, 127
        %v253 = vlaneseq
        %v254 = vshrl.u32 %v253, 7
        %v255 = vsub.s32 %v252, %v254
        %v256 = vrot.slane %v246, %v255
        %v259 = vlaneseq
        %v260 = vshrl.u32 %v259, 7
        %v261 = vsub.s32 %v252, %v260
        %v262 = vrot.slane %v249, %v261
        %vm264 = vcmask 1040384
        %v265 = vsel %vm264, %v256, %v262
        %v266 = vld [vmem:[%s1] sm:$0x3]
        %v267 = vld [vmem:[%s2] sm:$0x3]
        %269 = vset.pattern.permute.xlu0 0
        %270 = vperm.xlu0 %269, %v267
        %v271 = vpop.permute.xlu0 %270
        %vm273 = vcmask 64512
        %v275 = vsel %vm273, %v266, 0
        %v278 = vsel %vm273, %v265, 0
        %280 = vmatprep.subr.mxu0 0.0
        %281 = vmatpush1.xpose.msra.mxu0 %v278
        %282 = vmatprep.subr.mxu0 0.0
        %283 = vmatpush1.xpose.msra.mxu0 0.0
        %284 = vmatprep.subr.mxu0 0.0
        %285 = vmatpush1.xpose.msra.mxu0 0.0
        %286 = vmatprep.subr.mxu0 0.0
        %287 = vmatpush1.xpose.msra.mxu0 0.0
        %288 = vmatprep.subr.mxu0 0.0
        %289 = vmatpush1.xpose.msra.mxu0 0.0
        %290 = vmatprep.subr.mxu0 0.0
        %291 = vmatpush1.xpose.msra.mxu0 0.0
        %292 = vmatprep.subr.mxu0 0.0
        %293 = vmatpush1.xpose.msra.mxu0 0.0
        %294 = vmatprep.subr.mxu0 0.0
        %295 = vmatpush1.xpose.msra.mxu0 0.0
        %296 = vmatprep.subr.mxu0 0.0
        %297 = vmatpush1.xpose.msra.mxu0 0.0
        %298 = vmatprep.subr.mxu0 0.0
        %299 = vmatpush1.xpose.msra.mxu0 0.0
        %300 = vmatprep.subr.mxu0 0.0
        %301 = vmatpush1.xpose.msra.mxu0 0.0
        %302 = vmatprep.subr.mxu0 0.0
        %303 = vmatpush1.xpose.msra.mxu0 0.0
        %304 = vmatprep.subr.mxu0 0.0
        %305 = vmatpush1.xpose.msra.mxu0 0.0
        %306 = vmatprep.subr.mxu0 0.0
        %307 = vmatpush1.xpose.msra.mxu0 0.0
        %308 = vmatprep.subr.mxu0 0.0
        %309 = vmatpush1.xpose.msra.mxu0 0.0
        %310 = vmatprep.subr.mxu0 0.0
        %311 = vmatpush1.xpose.msra.mxu0 0.0
        %312 = vmatprep.subr.mxu0 0.0
        %313 = vmatpush1.xpose.msra.mxu0 0.0
        %314 = vmatprep.subr.mxu0 0.0
        %315 = vmatpush1.xpose.msra.mxu0 0.0
        %316 = vmatprep.subr.mxu0 0.0
        %317 = vmatpush1.xpose.msra.mxu0 0.0
        %318 = vmatprep.subr.mxu0 0.0
        %319 = vmatpush1.xpose.msra.mxu0 0.0
        %320 = vmatprep.subr.mxu0 0.0
        %321 = vmatpush1.xpose.msra.mxu0 0.0
        %322 = vmatprep.subr.mxu0 0.0
        %323 = vmatpush1.xpose.msra.mxu0 0.0
        %324 = vmatprep.subr.mxu0 0.0
        %325 = vmatpush1.xpose.msra.mxu0 0.0
        %326 = vmatprep.subr.mxu0 0.0
        %327 = vmatpush1.xpose.msra.mxu0 0.0
        %328 = vmatprep.subr.mxu0 0.0
        %329 = vmatpush1.xpose.msra.mxu0 0.0
        %330 = vmatprep.subr.mxu0 0.0
        %331 = vmatpush1.xpose.msra.mxu0 0.0
        %332 = vmatprep.subr.mxu0 0.0
        %333 = vmatpush1.xpose.msra.mxu0 0.0
        %334 = vmatprep.subr.mxu0 0.0
        %335 = vmatpush1.xpose.msra.mxu0 0.0
        %336 = vmatprep.subr.mxu0 0.0
        %337 = vmatpush1.xpose.msra.mxu0 0.0
        %338 = vmatprep.subr.mxu0 0.0
        %339 = vmatpush1.xpose.msra.mxu0 0.0
        %340 = vmatprep.subr.mxu0 0.0
        %341 = vmatpush1.xpose.msra.mxu0 0.0
        %342 = vmatprep.subr.mxu0 0.0
        %343 = vmatpush1.xpose.msra.mxu0 0.0
        %344 = vmatprep.mubr.f32.mxu0 0.0
        %345 = vmatmul.mubr.f32.gmra.mrb[0].mxu0 %v275
        %v346 = vpop.f32.mrb[0].mxu0
        %v347 = vadd.f32 %v271, %v346
        %v348 = vpop.f32.mrb[0].mxu0
        %349 = vdwg.mxu0
        %vm350 = vcmp.ge.f32.partialorder %v347, 0.0
        %v351 = vmul.f32 %v347, 0.2
        %v352 = vsel %vm350, %v347, %v351
        %v353 = vld [vmem:[%s3] sm:$0xff]
        %v354 = vld [vmem:[%s4] sm:$0xff]
        %356 = vset.pattern.permute.xlu0 0
        %357 = vperm.xlu0 %356, %v354
        %v358 = vpop.permute.xlu0 %357
        %vm360 = vcmask 15360
        %v362 = vsel %vm360, %v353, 0
        %vm364 = vcmask 1041408
        %v366 = vsel %vm364, %v352, 0
        %368 = vmatprep.subr.mxu0 0.0
        %369 = vmatpush1.msra.mxu0 %v366
        %370 = vmatprep.subr.mxu0 0.0
        %371 = vmatpush1.msra.mxu0 0.0
        %372 = vmatprep.subr.mxu0 0.0
        %373 = vmatpush1.msra.mxu0 0.0
        %374 = vmatprep.subr.mxu0 0.0
        %375 = vmatpush1.msra.mxu0 0.0
        %376 = vmatprep.subr.mxu0 0.0
        %377 = vmatpush1.msra.mxu0 0.0
        %378 = vmatprep.subr.mxu0 0.0
        %379 = vmatpush1.msra.mxu0 0.0
        %380 = vmatprep.subr.mxu0 0.0
        %381 = vmatpush1.msra.mxu0 0.0
        %382 = vmatprep.subr.mxu0 0.0
        %383 = vmatpush1.msra.mxu0 0.0
        %384 = vmatprep.subr.mxu0 0.0
        %385 = vmatpush1.msra.mxu0 0.0
        %386 = vmatprep.subr.mxu0 0.0
        %387 = vmatpush1.msra.mxu0 0.0
        %388 = vmatprep.subr.mxu0 0.0
        %389 = vmatpush1.msra.mxu0 0.0
        %390 = vmatprep.subr.mxu0 0.0
        %391 = vmatpush1.msra.mxu0 0.0
        %392 = vmatprep.subr.mxu0 0.0
        %393 = vmatpush1.msra.mxu0 0.0
        %394 = vmatprep.subr.mxu0 0.0
        %395 = vmatpush1.msra.mxu0 0.0
        %396 = vmatprep.subr.mxu0 0.0
        %397 = vmatpush1.msra.mxu0 0.0
        %398 = vmatprep.subr.mxu0 0.0
        %399 = vmatpush1.msra.mxu0 0.0
        %400 = vmatprep.subr.mxu0 0.0
        %401 = vmatpush1.msra.mxu0 0.0
        %402 = vmatprep.subr.mxu0 0.0
        %403 = vmatpush1.msra.mxu0 0.0
        %404 = vmatprep.subr.mxu0 0.0
        %405 = vmatpush1.msra.mxu0 0.0
        %406 = vmatprep.subr.mxu0 0.0
        %407 = vmatpush1.msra.mxu0 0.0
        %408 = vmatprep.subr.mxu0 0.0
        %409 = vmatpush1.msra.mxu0 0.0
        %410 = vmatprep.subr.mxu0 0.0
        %411 = vmatpush1.msra.mxu0 0.0
        %412 = vmatprep.subr.mxu0 0.0
        %413 = vmatpush1.msra.mxu0 0.0
        %414 = vmatprep.subr.mxu0 0.0
        %415 = vmatpush1.msra.mxu0 0.0
        %416 = vmatprep.subr.mxu0 0.0
        %417 = vmatpush1.msra.mxu0 0.0
        %418 = vmatprep.subr.mxu0 0.0
        %419 = vmatpush1.msra.mxu0 0.0
        %420 = vmatprep.subr.mxu0 0.0
        %421 = vmatpush1.msra.mxu0 0.0
        %422 = vmatprep.subr.mxu0 0.0
        %423 = vmatpush1.msra.mxu0 0.0
        %424 = vmatprep.subr.mxu0 0.0
        %425 = vmatpush1.msra.mxu0 0.0
        %426 = vmatprep.subr.mxu0 0.0
        %427 = vmatpush1.msra.mxu0 0.0
        %428 = vmatprep.subr.mxu0 0.0
        %429 = vmatpush1.msra.mxu0 0.0
        %430 = vmatprep.subr.mxu0 0.0
        %431 = vmatpush1.msra.mxu0 0.0
        %432 = vmatprep.mubr.f32.mxu0 0.0
        %433 = vmatmul.mubr.f32.gmra.mrb[0].mxu0 %v362
        %v434 = vpop.f32.mrb[0].mxu0
        %v435 = vadd.f32 %v358, %v434
        %v436 = vpop.f32.mrb[0].mxu0
        %437 = vdwg.mxu0
        %439 = vrot.lane.b32.xlu0 %v435, 127
        %v440 = vpop.permute.xlu0 %439
        %v442 = vadd.f32 %v435, %v440
        %v443 = vxor.u32 %v442, 2147483648
        %v444 = vmul.f32 %v443, 1.442695
        %v445 = vpow.pop %v444
        %v446 = vadd.f32 %v445, 1.0
        %v447 = vrcp.pop %v446
        %v448 = vmul.f32 1.0, %v447
        %vm449 = vcmask 7168
        %450 = vst.msk [vmem:[%s240] sm:$0xff] %vm449, %v448
        %p451 = scmp.lt.s32.totalorder %s19, 1
        %s452 = scalar_select %p451, %s19, 1
        %s453 = smul.addr %s452, 8
        %s454 = scalar_lea.vmem %s5, %s453
        // Predicated region
        $region45: #{tpu_custom_call.1} parent=39 // pred_check
          %p455 = pneg %p147
        $region46: #{tpu_custom_call.1} parent=39 // pred_check_branch
          %457 = sbr.rel (%p455) target = $region48
        $region47: #{tpu_custom_call.1} parent=39 // pred_region
          _
        $region48: #{tpu_custom_call.1} parent=39 // pred_fallthru
          _
      $region40: #{tpu_custom_call.1} parent=5 // pred_fallthru
        _
      %p458 = scmp.le.s32.totalorder 2, %s14
      // Predicated region
      $region49: #{tpu_custom_call.1} parent=5 // pred_check
        %p459 = pneg %p458
      $region50: #{tpu_custom_call.1} parent=5 // pred_check_branch
        %461 = sbr.rel (%p459) target = $region52
      $region51: #{tpu_custom_call.1} parent=5 // pred_region
        %s462 = ssub.s32 %s14, 2
        // Predicated region
        $region53: #{tpu_custom_call.1} parent=51 // pred_check
          %p463 = pneg %p153
        $region54: #{tpu_custom_call.1} parent=51 // pred_check_branch
          %465 = sbr.rel (%p463) target = $region56
        $region55: #{tpu_custom_call.1} parent=51 // pred_region
          %p466 = scmp.lt.s32.totalorder %s20, 1
          %s467 = scalar_select %p466, %s20, 1
          %s468 = smul.addr %s467, 8
          %s469 = scalar_lea.vmem %s5, %s468
        $region56: #{tpu_custom_call.1} parent=51 // pred_fallthru
          _
      $region52: #{tpu_custom_call.1} parent=5 // pred_fallthru
        _
    $region6: #{tpu_custom_call.1} parent=1 // loop_footer
      %s18 = sadd.s32 1, %s14
    $region7: #{tpu_custom_call.1} parent=1 // loop_footer_branch
      %13 = sbr.rel target = $region3
    $region8: #{tpu_custom_call.1} parent=1 // loop_exit
      _
    %470 = vsyncpa [#allocation3], 1
    %s471 = scalar_lea.sflag [#allocation3], 1
    %472 = vsyncpa %s471, 1

</llo_original>
